<compile_context>
chip_gen: v5e
topology: v5e:2x2
jax: 0.10.0
libtpu: 0.0.40
codegen_flags: <defaults>
</compile_context>

<pallas_src>
import functools

import jax
import jax.numpy as jnp
from jax import lax
from jax.experimental import pallas as pl
from jax.experimental.pallas import tpu as pltpu

ALPHA = 1.0
GAMMA = 2
EPS = 1e-07  # defined in the PyTorch module __init__ but unused in forward()

LANES = 128
SUBLANES = 8
CHUNK_ROWS = 256            # per-chunk VMEM load: 256*128*4B = 128 KiB per input
MAX_BLOCK_ROWS = 2048       # 2 inputs * 2 pipeline buffers * 1 MiB (f32) = 4 MiB
MIN_PALLAS_ELEMENTS = 64 * 1024   # below this, fused XLA beats kernel-launch cost


def _round_up(a, b):
    return ((a + b - 1) // b) * b


def _row_align(dtype):
    # Sublane alignment of the (rows, 128) block for a given element width:
    # 4B tile = (8,128), 2B (bf16) = (16,128), 1B (int8/bool/fp8) = (32,128).
    return {2: 16, 1: 32}.get(jnp.dtype(dtype).itemsize, 8)


def _focal_kernel(nvals_ref, x_ref, t_ref, psum_ref, *, binary_targets):
    """One grid step: lane-dense (8,128) partial focal-loss sum of its block.

    nvals_ref : SMEM int32[2] = [n // 128, n % 128]  (true element count n)
    x_ref     : (block_rows, 128) logits, native dtype (upcast after the DMA)
    t_ref     : (block_rows, 128) targets, native dtype
    psum_ref  : (8, 128) float32 partial sum for this block
    """
    block_rows = x_ref.shape[0]
    num_full, rem_rows = divmod(block_rows, CHUNK_ROWS)

    # Up to 4 independent sublane-group accumulators (32 rows = 4 vregs) so neither
    # the per-chunk reduce nor the loop carry forms a long serial add chain.
    acc_rows = 32
    while acc_rows > SUBLANES and (
        (num_full and CHUNK_ROWS % acc_rows) or (rem_rows and rem_rows % acc_rows)
    ):
        acc_rows //= 2

    full_rows = nvals_ref[0]          # number of completely valid 128-lane rows
    rem_lanes = nvals_ref[1]          # valid lanes in row `full_rows` (0 if none)
    block_row0 = pl.program_id(0) * block_rows

    def focal_elem(x, t):
        # Numerically stable BCE-with-logits, reduction='none':
        #   loss = max(x, 0) - x*t + log1p(exp(-|x|))
        s = jnp.exp(-jnp.abs(x))                    # the only exp (EUP)
        mx = jnp.maximum(x, 0.0)
        loss = mx - x * t + jnp.log1p(s)            # log1p (EUP)
        # pt = exp(-loss) = exp(x*t - max(x,0)) / (1 + s): rebuilt from s, so no
        # second exp is needed for binary targets.
        one_plus_s = 1.0 + s
        r = pl.reciprocal(one_plus_s, approx=True)  # cheap EUP vrcp
        r = r * (2.0 - one_plus_s * r)              # one Newton step -> ~f32-exact
        if binary_targets:
            # For t in {0,1}: exp(x*t - max(x,0)) == s iff sign(x) disagrees with t.
            num = jnp.where((t - 0.5) * x < 0.0, s, 1.0)
        else:
            num = jnp.exp(x * t - mx)               # soft targets: one extra exp
        pt = num * r
        q = 1.0 - pt
        mod = q * q if GAMMA == 2 else q ** GAMMA   # no float pow for gamma=2
        return (ALPHA * loss) * mod

    def chunk_sum(r0, nrows, row_iota, lane_iota):
        """Masked focal-loss sum of rows [r0, r0+nrows), reduced to (acc_rows,128)."""
        x = x_ref[pl.ds(r0, nrows), :].astype(jnp.float32)
        t = t_ref[pl.ds(r0, nrows), :].astype(jnp.float32)
        focal = focal_elem(x, t)
        # Validity mask: handles the ragged tail and rows past the array edge in the
        # final block.  For full blocks it is all-true and the select is a no-op --
        # a few VPU ops/element, well under the HBM roofline on v5e/v6e/v7x, so a
        # single code path is kept instead of a pl.when branch.
        g_row = row_iota + (block_row0 + r0)
        valid = (g_row < full_rows) | ((g_row == full_rows) & (lane_iota < rem_lanes))
        focal = jnp.where(valid, focal, 0.0)        # NaN/garbage in masked lanes is dropped
        # Sublane-group reduce: pure VPU vreg adds, no cross-lane XLU work.
        return focal.reshape(nrows // acc_rows, acc_rows, LANES).sum(axis=0)

    acc = jnp.zeros((acc_rows, LANES), jnp.float32)

    if num_full:
        # Iotas hoisted out of the loop (JAX does not CSE broadcast_in_dim).
        row_iota = lax.broadcasted_iota(jnp.int32, (CHUNK_ROWS, LANES), 0)
        lane_iota = lax.broadcasted_iota(jnp.int32, (CHUNK_ROWS, LANES), 1)

        def body(c, acc):
            r0 = pl.multiple_of(c * CHUNK_ROWS, CHUNK_ROWS)
            return acc + chunk_sum(r0, CHUNK_ROWS, row_iota, lane_iota)

        acc = lax.fori_loop(0, num_full, body, acc, unroll=True)

    if rem_rows:
        row_iota = lax.broadcasted_iota(jnp.int32, (rem_rows, LANES), 0)
        lane_iota = lax.broadcasted_iota(jnp.int32, (rem_rows, LANES), 1)
        acc = acc + chunk_sum(num_full * CHUNK_ROWS, rem_rows, row_iota, lane_iota)

    psum_ref[...] = acc.reshape(acc_rows // SUBLANES, SUBLANES, LANES).sum(axis=0)


def focal_loss_ref(logits, targets):
    """Pure-jnp reference implementation (also used as the small-input fallback)."""
    x = logits.astype(jnp.float32)
    t = targets.astype(jnp.float32)
    loss = jnp.maximum(x, 0.0) - x * t + jnp.log1p(jnp.exp(-jnp.abs(x)))
    pt = jnp.exp(-loss)
    return jnp.mean(ALPHA * loss * (1.0 - pt) ** GAMMA)


def _focal_pallas(logits, targets, binary_targets):
    n = int(logits.size)
    align = max(_row_align(logits.dtype), _row_align(targets.dtype))

    x = logits.reshape(-1)
    t = targets.reshape(-1)

    rows_data = -(-n // LANES)
    if n % LANES == 0 and (rows_data % align == 0 or rows_data >= 2 * align):
        # Zero-copy: the (rows, 128) view is a free reshape; rows past the valid
        # count inside the final block are masked in-kernel.
        rows = rows_data
    else:
        # Ragged tail (or tiny row count): minimal zero-pad in the native dtype.
        # Padded elements are masked in-kernel, so the pad value is irrelevant.
        rows = _round_up(max(rows_data, align), align)
        pad = rows * LANES - n
        x = jnp.pad(x, (0, pad))
        t = jnp.pad(t, (0, pad))
    x2 = x.reshape(rows, LANES)
    t2 = t.reshape(rows, LANES)

    # Balanced blocks: <= MAX_BLOCK_ROWS rows, multiple of the dtype alignment, and
    # >=2 blocks whenever possible so both v7x TensorCores get work.
    num_blocks = -(-rows // MAX_BLOCK_ROWS)
    if num_blocks == 1 and rows >= 2 * align:
        num_blocks = 2
    block_rows = _round_up(-(-rows // num_blocks), align)
    num_blocks = -(-rows // block_rows)

    nvals = jnp.array([n // LANES, n % LANES], dtype=jnp.int32)
    kernel = functools.partial(_focal_kernel, binary_targets=binary_targets)

    partials = pl.pallas_call(
        kernel,
        out_shape=jax.ShapeDtypeStruct((num_blocks * SUBLANES, LANES), jnp.float32),
        grid_spec=pltpu.PrefetchScalarGridSpec(
            num_scalar_prefetch=1,
            grid=(num_blocks,),
            in_specs=[
                pl.BlockSpec((block_rows, LANES), lambda i, nv: (i, 0)),
                pl.BlockSpec((block_rows, LANES), lambda i, nv: (i, 0)),
            ],
            out_specs=pl.BlockSpec((SUBLANES, LANES), lambda i, nv: (i, 0)),
        ),
        compiler_params=pltpu.CompilerParams(
            dimension_semantics=("parallel",),
            vmem_limit_bytes=32 * 1024 * 1024,
        ),
    )(nvals, x2, t2)

    # Tiny finalize: one cross-lane reduce of num_blocks*8*128 partials + mean over
    # the true element count (not the padded count).
    return jnp.sum(partials) / jnp.float32(n)


def focal_loss(logits, targets, *, binary_targets=True, use_pallas=None):
    """Focal loss (sigmoid / BCE-with-logits), mean reduction.  alpha=1, gamma=2.

    binary_targets: targets are exactly {0,1} (segmentation masks) -> single-exp
        fast path.  Pass False for soft targets.
    use_pallas: None = auto (Pallas only above MIN_PALLAS_ELEMENTS where HBM
        traffic is non-trivial); True/False forces the choice.
    """
    assert logits.shape == targets.shape, (logits.shape, targets.shape)
    if use_pallas is None:
        use_pallas = logits.size >= MIN_PALLAS_ELEMENTS
    if not use_pallas:
        # Tiny inputs: fixed pallas_call/DMA/grid overhead dominates -> let XLA fuse.
        return focal_loss_ref(logits, targets)
    return _focal_pallas(logits, targets, binary_targets)


# TODO(synk): the module's activation='softmax' branch (F.cross_entropy) is not
# implemented; only the default sigmoid / BCE-with-logits path is translated.


if __name__ == "__main__":
    key = jax.random.PRNGKey(0)
    k1, k2, k3, k4 = jax.random.split(key, 4)

    fl_pallas = jax.jit(functools.partial(focal_loss, use_pallas=True))
    fl_pallas_soft = jax.jit(
        functools.partial(focal_loss, use_pallas=True, binary_targets=False))
    fl_auto = jax.jit(focal_loss)

    # (a) NCHW segmentation-style logits + binary mask, forced through the kernel.
    x = jax.random.normal(k1, (2, 4, 16, 16), dtype=jnp.float32)
    tgt = (jax.random.uniform(k2, (2, 4, 16, 16)) > 0.5).astype(jnp.float32)
    out = fl_pallas(x, tgt)
    jax.block_until_ready(out)
    ref = focal_loss_ref(x, tgt)
    assert jnp.allclose(out, ref, rtol=1e-4, atol=1e-6), (out, ref)

    # (b) ragged element count (not a multiple of 8*128): exercises the iota mask.
    xr = jax.random.normal(k3, (3, 5, 7, 11), dtype=jnp.float32)
    tr = (jax.random.uniform(k4, (3, 5, 7, 11)) > 0.5).astype(jnp.float32)
    out_r = fl_pallas(xr, tr)
    ref_r = focal_loss_ref(xr, tr)
    assert jnp.allclose(out_r, ref_r, rtol=1e-4, atol=1e-6), (out_r, ref_r)

    # (c) bf16 pass-through: no wrapper-side cast, kernel upcasts after the DMA.
    xb, tb = x.astype(jnp.bfloat16), tgt.astype(jnp.bfloat16)
    out_b = fl_pallas(xb, tb)
    ref_b = focal_loss_ref(xb, tb)
    assert jnp.allclose(out_b, ref_b, rtol=1e-4, atol=1e-6), (out_b, ref_b)

    # (d) soft (non-binary) targets use the general kernel variant.
    ts = jax.random.uniform(k2, (2, 4, 16, 16), dtype=jnp.float32)
    out_s = fl_pallas_soft(x, ts)
    ref_s = focal_loss_ref(x, ts)
    assert jnp.allclose(out_s, ref_s, rtol=1e-4, atol=1e-6), (out_s, ref_s)

    # (e) default auto path: tiny input takes the fused-XLA fallback.
    out_auto = fl_auto(x, tgt)
    assert jnp.allclose(out_auto, ref, rtol=1e-5, atol=1e-6), (out_auto, ref)

    jax.block_until_ready((out, out_r, out_b, out_s, out_auto))
    print("KERNEL_OK")
</pallas_src>

<mosaic_0001>
module attributes {stable_mosaic.version = 11 : i64} {
  func.func @_focal_kernel(%arg0: i32, %arg1: memref<2xi32, #tpu.memory_space<smem>>, %arg2: memref<8x128xf32, #tpu.memory_space<vmem>>, %arg3: memref<8x128xf32, #tpu.memory_space<vmem>>, %arg4: memref<8x128xf32, #tpu.memory_space<vmem>>) attributes {dimension_semantics = [#tpu.dimension_semantics<parallel>], iteration_bounds = array<i64: 2>, scalar_prefetch = 1 : i64, scratch_operands = 0 : i64, tpu.core_type = #tpu.core_type<tc>, window_params = [{transform_indices = @transform_0, window_bounds = array<i64: 8, 128>}, {transform_indices = @transform_1, window_bounds = array<i64: 8, 128>}, {transform_indices = @transform_2, window_bounds = array<i64: 8, 128>}]} {
    %c0 = arith.constant 0 : index
    %0 = memref.load %arg1[%c0] : memref<2xi32, #tpu.memory_space<smem>>
    %c1 = arith.constant 1 : index
    %1 = memref.load %arg1[%c1] : memref<2xi32, #tpu.memory_space<smem>>
    %c8_i32 = arith.constant 8 : i32
    %2 = arith.muli %arg0, %c8_i32 : i32
    %cst = arith.constant 0.000000e+00 : f32
    %3 = vector.broadcast %cst : f32 to vector<8x128xf32>
    %4 = tpu.iota {dimensions = array<i32: 0>} : vector<8x128xi32>
    %5 = tpu.iota {dimensions = array<i32: 1>} : vector<8x128xi32>
    %c0_0 = arith.constant 0 : index
    %c0_1 = arith.constant 0 : index
    %6 = vector.load %arg2[%c0_0, %c0_1] : memref<8x128xf32, #tpu.memory_space<vmem>>, vector<8x128xf32>
    %c0_2 = arith.constant 0 : index
    %c0_3 = arith.constant 0 : index
    %7 = vector.load %arg3[%c0_2, %c0_3] : memref<8x128xf32, #tpu.memory_space<vmem>>, vector<8x128xf32>
    %8 = math.absf %6 : vector<8x128xf32>
    %cst_4 = arith.constant 0.000000e+00 : f32
    %9 = vector.broadcast %cst_4 : f32 to vector<8x128xf32>
    %10 = arith.subf %9, %8 : vector<8x128xf32>
    %11 = math.exp %10 : vector<8x128xf32>
    %cst_5 = arith.constant 0.000000e+00 : f32
    %12 = vector.broadcast %cst_5 : f32 to vector<8x128xf32>
    %13 = arith.maximumf %6, %12 : vector<8x128xf32>
    %14 = arith.mulf %6, %7 : vector<8x128xf32>
    %15 = arith.subf %13, %14 : vector<8x128xf32>
    %16 = math.log1p %11 : vector<8x128xf32>
    %17 = arith.addf %15, %16 : vector<8x128xf32>
    %cst_6 = arith.constant 1.000000e+00 : f32
    %18 = vector.broadcast %cst_6 : f32 to vector<8x128xf32>
    %19 = arith.addf %18, %11 : vector<8x128xf32>
    %20 = tpu.reciprocal %19 {approx = true} : vector<8x128xf32> -> vector<8x128xf32>
    %21 = arith.mulf %19, %20 : vector<8x128xf32>
    %cst_7 = arith.constant 2.000000e+00 : f32
    %22 = vector.broadcast %cst_7 : f32 to vector<8x128xf32>
    %23 = arith.subf %22, %21 : vector<8x128xf32>
    %24 = arith.mulf %20, %23 : vector<8x128xf32>
    %cst_8 = arith.constant 5.000000e-01 : f32
    %25 = vector.broadcast %cst_8 : f32 to vector<8x128xf32>
    %26 = arith.subf %7, %25 : vector<8x128xf32>
    %27 = arith.mulf %26, %6 : vector<8x128xf32>
    %cst_9 = arith.constant 0.000000e+00 : f32
    %28 = vector.broadcast %cst_9 : f32 to vector<8x128xf32>
    %29 = arith.cmpf olt, %27, %28 : vector<8x128xf32>
    %cst_10 = arith.constant 1.000000e+00 : f32
    %30 = vector.broadcast %cst_10 : f32 to vector<8x128xf32>
    %31 = arith.select %29, %11, %30 : vector<8x128xi1>, vector<8x128xf32>
    %32 = arith.mulf %31, %24 : vector<8x128xf32>
    %cst_11 = arith.constant 1.000000e+00 : f32
    %33 = vector.broadcast %cst_11 : f32 to vector<8x128xf32>
    %34 = arith.subf %33, %32 : vector<8x128xf32>
    %35 = arith.mulf %34, %34 : vector<8x128xf32>
    %cst_12 = arith.constant 1.000000e+00 : f32
    %36 = vector.broadcast %cst_12 : f32 to vector<8x128xf32>
    %37 = arith.mulf %36, %17 : vector<8x128xf32>
    %38 = arith.mulf %37, %35 : vector<8x128xf32>
    %c0_i32 = arith.constant 0 : i32
    %39 = arith.addi %2, %c0_i32 : i32
    %40 = vector.broadcast %39 : i32 to vector<8x128xi32>
    %41 = arith.addi %4, %40 : vector<8x128xi32>
    %42 = vector.broadcast %0 : i32 to vector<8x128xi32>
    %43 = arith.cmpi slt, %41, %42 : vector<8x128xi32>
    %44 = vector.broadcast %0 : i32 to vector<8x128xi32>
    %45 = arith.cmpi eq, %41, %44 : vector<8x128xi32>
    %46 = vector.broadcast %1 : i32 to vector<8x128xi32>
    %47 = arith.cmpi slt, %5, %46 : vector<8x128xi32>
    %48 = arith.andi %45, %47 : vector<8x128xi1>
    %49 = arith.ori %43, %48 : vector<8x128xi1>
    %cst_13 = arith.constant 0.000000e+00 : f32
    %50 = vector.broadcast %cst_13 : f32 to vector<8x128xf32>
    %51 = arith.select %49, %38, %50 : vector<8x128xi1>, vector<8x128xf32>
    %52 = vector.shape_cast %51 : vector<8x128xf32> to vector<1x8x128xf32>
    %cst_14 = arith.constant dense<0.000000e+00> : vector<8x128xf32>
    %53 = vector.multi_reduction <add>, %52, %cst_14 [0] : vector<1x8x128xf32> to vector<8x128xf32>
    %54 = arith.addf %3, %53 : vector<8x128xf32>
    %55 = vector.shape_cast %54 : vector<8x128xf32> to vector<1x8x128xf32>
    %cst_15 = arith.constant dense<0.000000e+00> : vector<8x128xf32>
    %56 = vector.multi_reduction <add>, %55, %cst_15 [0] : vector<1x8x128xf32> to vector<8x128xf32>
    %c0_16 = arith.constant 0 : index
    %c0_17 = arith.constant 0 : index
    %57 = vector.load %arg4[%c0_16, %c0_17] : memref<8x128xf32, #tpu.memory_space<vmem>>, vector<8x128xf32>
    tpu.vector_store %arg4[%c0_16, %c0_17], %56 {strides = array<i32>} : memref<8x128xf32, #tpu.memory_space<vmem>>, vector<8x128xf32>,
    return
  }
  func.func @transform_0(%arg0: i32, %arg1: memref<2xi32, #tpu.memory_space<smem>>) -> (i32, i32) {
    %c0_i32 = arith.constant 0 : i32
    %c0_i32_0 = arith.constant 0 : i32
    return %arg0, %c0_i32 : i32, i32
  }
  func.func @transform_1(%arg0: i32, %arg1: memref<2xi32, #tpu.memory_space<smem>>) -> (i32, i32) {
    %c0_i32 = arith.constant 0 : i32
    %c0_i32_0 = arith.constant 0 : i32
    return %arg0, %c0_i32 : i32, i32
  }
  func.func @transform_2(%arg0: i32, %arg1: memref<2xi32, #tpu.memory_space<smem>>) -> (i32, i32) {
    %c0_i32 = arith.constant 0 : i32
    %c0_i32_0 = arith.constant 0 : i32
    return %arg0, %c0_i32 : i32, i32
  }
}

</mosaic_0001>

<llo_original>
// kernel: focal_loss.1
$region0: #{focal_loss.1}
  #allocation0 [shape = 'u32[]', space=smem, size = 0x4, offset = 0x4, fixed_abs, tag = 'smem constant byte address 0x4 - core index']
  #allocation1 [shape = 'u32[72,128]{1,0:T(1,128)}', space=vmem, size = 0x9000, scoped, tag = 'internal scratch']
  #allocation2 [shape = 's32[1]{0}', space=sflag, size = 0x4, scoped, tag = 'scoped memory for focal_loss.1']
  #allocation3 [shape = 'u8[512]{0}', space=smem, size = 0x200, scoped, tag = 'prefetched SMEM operand 0']
  %s0 = inlined_call_operand.vmem [shape: s32[2], index: 0, kind: input, shape index: {}]
  %s1 = inlined_call_operand.vmem [shape: f32[16,128], index: 1, kind: input, shape index: {}]
  %s2 = inlined_call_operand.vmem [shape: f32[16,128], index: 2, kind: input, shape index: {}]
  %s3 = inlined_call_operand.vmem [shape: f32[16,128], index: 3, kind: output, shape index: {}]
  %s4 = sld [smem:[#allocation0]]
  $region41: #{focal_loss.1} parent=0
    _
  %s6 = ssub.s32 1, %s4
  %s7 = scalar_select 0, %s6, %s4
  %s9 = sshll.u32 %s0, 4
  %s10 = int_to_ptr.vmem [resolvable:$true] %s9
  %12 = dma.vmem_to_smem %s10, 16, [#allocation3], [#allocation2]
  %14 = dma.done [#allocation2], 16
  %15 = sfence
  loop: start=0, step=1, limit=4
  $region2: #{focal_loss.1} parent=0 // loop_pre_header
    _
  $region3: #{focal_loss.1} parent=0 // loop_header
    %s17 = sphi 0, %s21
    %p18 = scmp.ge.s32.totalorder %s17, 4
    %s27 = sphi 0, %s29
    %s30 = sphi 0, %s27
    %s31 = sphi 0, %s30
    %s47 = sphi 0, %s31
    %s53 = sphi 0, %s55
    %s56 = sphi 0, %s53
    %s57 = sphi 0, %s56
    %s73 = sphi 0, %s57
    %s79 = sphi 0, %s81
    %s82 = sphi 0, %s79
    %s83 = sphi 0, %s82
    %s99 = sphi 0, %s83
  $region4: #{focal_loss.1} parent=0 // loop_header_branch
    %20 = sbr.rel (%p18) target = $region8
  $region5: #{focal_loss.1} parent=0 // loop_body
    %s22 = ssub.s32 %s17, 1
    %s23 = ssub.s32 %s17, 2
    %s24 = sadd.s32 %s17, 1
    %s25 = ssub.s32 %s17, %s24
    %p26 = scmp.eq.s32.totalorder %s25, 0
    %s28 = sadd.s32 %s27, 1
    %s29 = scalar_select %p26, %s27, %s28
    %p32 = pneg %p26
    %p33 = scmp.eq.s32.totalorder %s17, 1
    %p34 = por %p32, %p33
    %p35 = scmp.ne.s32.totalorder %s27, %s30
    %p36 = scmp.eq.s32.totalorder %s17, 0
    %p37 = por %p35, %p36
    %p38 = scmp.ne.s32.totalorder %s27, %s30
    %p39 = scmp.eq.s32.totalorder %s22, 1
    %p40 = por %p38, %p39
    %p41 = scmp.ne.s32.totalorder %s30, %s31
    %p42 = scmp.eq.s32.totalorder %s22, 0
    %p43 = por %p41, %p42
    %p44 = scmp.ne.s32.totalorder %s30, %s31
    %p45 = scmp.eq.s32.totalorder %s23, 1
    %p46 = por %p44, %p45
    %p48 = scmp.ne.s32.totalorder %s31, %s47
    %p49 = scmp.eq.s32.totalorder %s23, 0
    %p50 = por %p48, %p49
    %s51 = ssub.s32 %s17, %s24
    %p52 = scmp.eq.s32.totalorder %s51, 0
    %s54 = sadd.s32 %s53, 1
    %s55 = scalar_select %p52, %s53, %s54
    %p58 = pneg %p52
    %p59 = scmp.eq.s32.totalorder %s17, 1
    %p60 = por %p58, %p59
    %p61 = scmp.ne.s32.totalorder %s53, %s56
    %p62 = scmp.eq.s32.totalorder %s17, 0
    %p63 = por %p61, %p62
    %p64 = scmp.ne.s32.totalorder %s53, %s56
    %p65 = scmp.eq.s32.totalorder %s22, 1
    %p66 = por %p64, %p65
    %p67 = scmp.ne.s32.totalorder %s56, %s57
    %p68 = scmp.eq.s32.totalorder %s22, 0
    %p69 = por %p67, %p68
    %p70 = scmp.ne.s32.totalorder %s56, %s57
    %p71 = scmp.eq.s32.totalorder %s23, 1
    %p72 = por %p70, %p71
    %p74 = scmp.ne.s32.totalorder %s57, %s73
    %p75 = scmp.eq.s32.totalorder %s23, 0
    %p76 = por %p74, %p75
    %s77 = ssub.s32 %s17, %s24
    %p78 = scmp.eq.s32.totalorder %s77, 0
    %s80 = sadd.s32 %s79, 1
    %s81 = scalar_select %p78, %s79, %s80
    %p84 = pneg %p78
    %p85 = scmp.eq.s32.totalorder %s17, 1
    %p86 = por %p84, %p85
    %p87 = scmp.ne.s32.totalorder %s79, %s82
    %p88 = scmp.eq.s32.totalorder %s17, 0
    %p89 = por %p87, %p88
    %p90 = scmp.ne.s32.totalorder %s79, %s82
    %p91 = scmp.eq.s32.totalorder %s22, 1
    %p92 = por %p90, %p91
    %p93 = scmp.ne.s32.totalorder %s82, %s83
    %p94 = scmp.eq.s32.totalorder %s22, 0
    %p95 = por %p93, %p94
    %p96 = scmp.ne.s32.totalorder %s82, %s83
    %p97 = scmp.eq.s32.totalorder %s23, 1
    %p98 = por %p96, %p97
    %p100 = scmp.ne.s32.totalorder %s83, %s99
    %p101 = scmp.eq.s32.totalorder %s23, 0
    %p102 = por %p100, %p101
    %p103 = scmp.le.s32.totalorder 1, %s17
    %p104 = scmp.lt.s32.totalorder %s17, 3
    %p105 = pnand %p103, %p104
    %p106 = pneg %p105
    // Predicated region
    $region9: #{focal_loss.1} parent=5 // pred_check
      _
    $region10: #{focal_loss.1} parent=5 // pred_check_branch
      %108 = sbr.rel (%p105) target = $region12
    $region11: #{focal_loss.1} parent=5 // pred_region
      %s109 = ssub.s32 %s17, 1
    $region12: #{focal_loss.1} parent=5 // pred_fallthru
      _
    %p110 = scmp.lt.s32.totalorder %s17, 2
    // Predicated region
    $region13: #{focal_loss.1} parent=5 // pred_check
      %p111 = pneg %p110
    $region14: #{focal_loss.1} parent=5 // pred_check_branch
      %113 = sbr.rel (%p111) target = $region16
    $region15: #{focal_loss.1} parent=5 // pred_region
      // Predicated region
      $region17: #{focal_loss.1} parent=15 // pred_check
        %p114 = pneg %p37
      $region18: #{focal_loss.1} parent=15 // pred_check_branch
        %116 = sbr.rel (%p114) target = $region20
      $region19: #{focal_loss.1} parent=15 // pred_region
        %p117 = scmp.lt.s32.totalorder %s17, 1
        %s118 = scalar_select %p117, %s17, 1
        %s119 = smul.addr %s118, 8
        %s120 = scalar_lea.vmem %s1, %s119
      $region20: #{focal_loss.1} parent=15 // pred_fallthru
        _
      // Predicated region
      $region21: #{focal_loss.1} parent=15 // pred_check
        %p121 = pneg %p63
      $region22: #{focal_loss.1} parent=15 // pred_check_branch
        %123 = sbr.rel (%p121) target = $region24
      $region23: #{focal_loss.1} parent=15 // pred_region
        %p124 = scmp.lt.s32.totalorder %s17, 1
        %s125 = scalar_select %p124, %s17, 1
        %s126 = smul.addr %s125, 8
        %s127 = scalar_lea.vmem %s2, %s126
      $region24: #{focal_loss.1} parent=15 // pred_fallthru
        _
    $region16: #{focal_loss.1} parent=5 // pred_fallthru
      _
    %p128 = scmp.le.s32.totalorder 1, %s17
    %p129 = scmp.lt.s32.totalorder %s17, 3
    %p130 = pnand %p128, %p129
    %p131 = pneg %p130
    // Predicated region
    $region25: #{focal_loss.1} parent=5 // pred_check
      _
    $region26: #{focal_loss.1} parent=5 // pred_check_branch
      %133 = sbr.rel (%p130) target = $region28
    $region27: #{focal_loss.1} parent=5 // pred_region
      %s134 = ssub.s32 %s17, 1
      %p135 = scmp.lt.s32.totalorder %s22, 1
      %s136 = scalar_select %p135, %s22, 1
      %s137 = smul.addr %s136, 8
      %s138 = scalar_lea.vmem %s1, %s137
      %p139 = pneg %p43
      %p140 = pneg %p40
      %p141 = scmp.lt.s32.totalorder %s22, 1
      %s142 = scalar_select %p141, %s22, 1
      %s143 = smul.addr %s142, 8
      %s144 = scalar_lea.vmem %s2, %s143
      %p145 = pneg %p69
      %p146 = pneg %p66
      %p147 = pneg %p95
      %p148 = pneg %p92
      %p149 = scmp.lt.s32.totalorder %s22, 1
      %s150 = scalar_select %p149, %s22, 1
      %s151 = smul.addr %s150, 8
      %s152 = scalar_lea.vmem %s3, %s151
      %p153 = scmp.lt.s32.totalorder %s22, 1
      %s154 = scalar_select %p153, %s22, 1
      %s155 = smul.addr %s154, 8
      %s156 = scalar_lea.vmem %s1, %s155
      %p157 = scmp.lt.s32.totalorder %s22, 1
      %s158 = scalar_select %p157, %s22, 1
      %s159 = smul.addr %s158, 8
      %s160 = scalar_lea.vmem %s2, %s159
      %p161 = scmp.lt.s32.totalorder %s22, 1
      %s162 = scalar_select %p161, %s22, 1
      %s163 = smul.addr %s162, 8
      %s164 = scalar_lea.vmem %s3, %s163
      %s165 = sld [smem:[#allocation3]]
      %s166 = sld [smem:[#allocation3 + $0x1]]
      %s167 = smul.u32 %s22, 8
      %v168 = vlaneseq
      %v169 = vshrl.u32 %v168, 7
      %v170 = vlaneseq
      %v171 = vand.u32 %v170, 127
      %v172 = vld [vmem:[%s156] sm:$0xff]
      %v173 = vld [vmem:[%s160] sm:$0xff]
      %v174 = vand.u32 2147483647, %v172
      %v175 = vsub.f32 0.0, %v174
      %v176 = vmul.f32 %v175, 1.442695
      %v177 = vpow.pop %v176
      %v178 = vmax.f32 %v172, 0.0
      %v179 = vmul.f32 %v172, %v173
      %v180 = vsub.f32 %v178, %v179
      %v181 = vadd.f32 %v177, 1.0
      %v182 = vlog2.pop %v181
      %v183 = vmul.f32 %v182, 0.6931472
      %v184 = vmul.f32 -0.5, %v177
      %v185 = vadd.f32 %v184, 1.0
      %v186 = vmul.f32 %v185, %v177
      %v187 = vand.u32 2147483647, %v177
      %vm188 = vcmp.lt.f32.partialorder %v187, 0.0004427343
      %v189 = vsel %vm188, %v186, %v183
      %v190 = vadd.f32 %v180, %v189
      %v191 = vadd.f32 %v177, 1.0
      %v192 = vrcp.pop %v191
      %v193 = vmul.f32 %v191, %v192
      %v194 = vsub.f32 2.0, %v193
      %v195 = vmul.f32 %v192, %v194
      %v196 = vsub.f32 %v173, 0.5
      %v197 = vmul.f32 %v196, %v172
      %vm198 = vcmp.lt.f32.partialorder %v197, 0.0
      %v199 = vsel %vm198, %v177, 1.0
      %v200 = vmul.f32 %v199, %v195
      %v201 = vsub.f32 1.0, %v200
      %v202 = vmul.f32 %v201, %v201
      %v203 = vmul.f32 %v190, %v202
      %v204 = vstv %s167
      %v205 = vadd.s32 %v169, %v204
      %v206 = vstv %s165
      %vm207 = vcmp.lt.s32.totalorder %v205, %v206
      %vm208 = vcmp.eq.s32.totalorder %v205, %v206
      %v209 = vstv %s166
      %vm210 = vcmp.lt.s32.totalorder %v171, %v209
      %vm211 = vmand %vm208, %vm210
      %vm212 = vmor %vm207, %vm211
      %v213 = vsel %vm212, %v203, 0.0
      %v214 = vadd.f32 %v213, 0.0
      %v215 = vadd.f32 %v214, 0.0
      %v216 = vadd.f32 %v215, 0.0
      %217 = vst [vmem:[%s164] sm:$0xff] %v216
      %p218 = scmp.lt.s32.totalorder %s22, 1
      %s219 = scalar_select %p218, %s22, 1
      %s220 = smul.addr %s219, 8
      %s221 = scalar_lea.vmem %s3, %s220
      // Predicated region
      $region29: #{focal_loss.1} parent=27 // pred_check
        %p222 = pneg %p92
      $region30: #{focal_loss.1} parent=27 // pred_check_branch
        %224 = sbr.rel (%p222) target = $region32
      $region31: #{focal_loss.1} parent=27 // pred_region
        _
      $region32: #{focal_loss.1} parent=27 // pred_fallthru
        _
    $region28: #{focal_loss.1} parent=5 // pred_fallthru
      _
    %p225 = scmp.le.s32.totalorder 2, %s17
    // Predicated region
    $region33: #{focal_loss.1} parent=5 // pred_check
      %p226 = pneg %p225
    $region34: #{focal_loss.1} parent=5 // pred_check_branch
      %228 = sbr.rel (%p226) target = $region36
    $region35: #{focal_loss.1} parent=5 // pred_region
      %s229 = ssub.s32 %s17, 2
      // Predicated region
      $region37: #{focal_loss.1} parent=35 // pred_check
        %p230 = pneg %p98
      $region38: #{focal_loss.1} parent=35 // pred_check_branch
        %232 = sbr.rel (%p230) target = $region40
      $region39: #{focal_loss.1} parent=35 // pred_region
        %p233 = scmp.lt.s32.totalorder %s23, 1
        %s234 = scalar_select %p233, %s23, 1
        %s235 = smul.addr %s234, 8
        %s236 = scalar_lea.vmem %s3, %s235
      $region40: #{focal_loss.1} parent=35 // pred_fallthru
        _
    $region36: #{focal_loss.1} parent=5 // pred_fallthru
      _
  $region6: #{focal_loss.1} parent=0 // loop_footer
    %s21 = sadd.s32 1, %s17
  $region7: #{focal_loss.1} parent=0 // loop_footer_branch
    %16 = sbr.rel target = $region3
  $region8: #{focal_loss.1} parent=0 // loop_exit
    _

</llo_original>
